<compile_context>
chip_gen: v7x
topology: tpu7x:2x2x1
jax: 0.10.0
libtpu: 0.0.40
codegen_flags: <defaults>
</compile_context>

<pallas_src>
import functools

import jax
import jax.numpy as jnp
from jax.experimental import pallas as pl
from jax.experimental.pallas import tpu as pltpu

LANES = 128


def _round_up(x, m):
    return (x + m - 1) // m * m


def _readout_block_kernel(x_ref, wt_ref, b_ref, out_ref, mem_ref, *, decay):
    """One grid point == one (batch-block, time-block) tile.

    x_ref  : (T_BLK, B_BLK, input_dim)   bf16 activations for this tile
    wt_ref : (input_dim, output_dim)     bf16 W.T  (constant index -> VMEM-resident)
    b_ref  : (1, output_dim)             f32 bias  (constant index -> VMEM-resident)
    out_ref: (T_BLK, B_BLK, output_dim)  f32 per-step membrane outputs
    mem_ref: (B_BLK, output_dim)         f32 scratch carrying the membrane across time blocks
    """
    tb = pl.program_id(1)          # time-block index (innermost, "arbitrary")

    @pl.when(tb == 0)
    def _():
        mem_ref[...] = jnp.zeros_like(mem_ref)

    t_blk, b_blk, in_dim = x_ref.shape
    out_dim = out_ref.shape[-1]

    # Linear hoisted out of the recurrence: y_t never depends on mem, so run ONE
    # MXU matmul over all T_BLK*B_BLK rows of this block (f32 accumulation).
    x2d = x_ref[...].reshape(t_blk * b_blk, in_dim)
    y = jnp.dot(x2d, wt_ref[...], preferred_element_type=jnp.float32)
    y = y.reshape(t_blk, b_blk, out_dim) + b_ref[...]       # bias broadcast over (t, b)

    # Non-spiking LIF readout recurrence (no threshold / no reset):
    # cheap unrolled VPU scan over the precomputed Y rows.
    mem = mem_ref[...]
    for t in range(t_blk):          # static unroll; t_blk kept small (<= 32)
        mem = decay * mem + y[t]
        out_ref[t] = mem
    mem_ref[...] = mem


def prepare_readout_params(weight, bias, matmul_dtype=jnp.bfloat16):
    """One-time parameter prep (hoisted out of the per-call path).

    weight : (output_dim, input_dim)  nn.Linear weight
    bias   : (output_dim,)            nn.Linear bias
    returns (W.T in matmul dtype, bias as (1, output_dim) f32)
    """
    wt = jnp.asarray(weight).astype(matmul_dtype).T            # (input_dim, output_dim)
    b2 = jnp.asarray(bias).astype(jnp.float32).reshape(1, -1)  # (1, output_dim)
    return wt, b2


def readout_forward_all_steps(xs, wt, b2, *, decay=0.8, t_block=16, b_block=None,
                              matmul_dtype=jnp.bfloat16):
    """Run ReadoutLayer.forward over all timesteps in a single fused kernel.

    xs : (n_steps, *leading, input_dim) per-step inputs
    wt : (input_dim, output_dim)        prepared W.T (see prepare_readout_params)
    b2 : (1, output_dim)                prepared bias
    returns (n_steps, B, output_dim)    membrane potential after each step
    """
    input_dim, output_dim = wt.shape
    n_steps = xs.shape[0]
    x2 = xs.reshape(n_steps, -1, input_dim)
    B = x2.shape[1]

    # Row alignment 16 keeps the (time, batch) -> rows collapse layout-trivial for
    # packed bf16 operands (8 would suffice for an f32 matmul path).
    row_align = 16 if matmul_dtype == jnp.bfloat16 else 8
    if b_block is None:
        b_block = _round_up(B, row_align)
    b_block = _round_up(b_block, row_align)
    Bp = _round_up(B, b_block)

    t_block = max(1, min(t_block, n_steps))
    Tp = _round_up(n_steps, t_block)

    # Cast the activation stream once (bf16 halves x HBM traffic; recurrence stays f32).
    x2 = x2.astype(matmul_dtype)
    if Tp != n_steps or Bp != B:
        x2 = jnp.pad(x2, ((0, Tp - n_steps), (0, Bp - B), (0, 0)))

    n_bblocks = Bp // b_block
    n_tblocks = Tp // t_block

    # VMEM budget for the chosen tiles (lane/sublane padded, double-buffered streams),
    # capped at v7x's 64 MiB physical VMEM.
    x_itемsize = jnp.dtype(matmul_dtype).itemsize
    x_blk_bytes = t_block * b_block * _round_up(input_dim, LANES) * x_itемsize
    out_blk_bytes = t_block * b_block * _round_up(output_dim, LANES) * 4
    wt_bytes = _round_up(input_dim, 16) * _round_up(output_dim, LANES) * x_itемsize
    bias_bytes = 8 * LANES * 4
    mem_bytes = b_block * _round_up(output_dim, LANES) * 4
    vmem_needed = 2 * (x_blk_bytes + out_blk_bytes + wt_bytes + bias_bytes) \
        + mem_bytes + out_blk_bytes
    vmem_limit = int(min(64 << 20, max(2 * vmem_needed, 32 << 20)))

    kernel = functools.partial(_readout_block_kernel, decay=float(decay))

    out = pl.pallas_call(
        kernel,
        out_shape=jax.ShapeDtypeStruct((Tp, Bp, output_dim), jnp.float32),
        grid=(n_bblocks, n_tblocks),
        in_specs=[
            # Activation tile for this (batch-block, time-block).
            pl.BlockSpec((t_block, b_block, input_dim), lambda b, t: (t, b, 0)),
            # Weight / bias: constant block index -> stay VMEM-resident for the whole scan.
            # TODO(synk): at real model scale set pipeline_mode=pl.Buffered(1) on these so
            #             the constant-index weight is not double-buffered (matters under
            #             v7x's 64 MiB VMEM); negligible at this size.
            pl.BlockSpec((input_dim, output_dim), lambda b, t: (0, 0)),
            pl.BlockSpec((1, output_dim), lambda b, t: (0, 0)),
        ],
        # Output kept unpadded (last dim = output_dim): no 8x writeback inflation and
        # no extra wrapper slice-copy for small output_dim.
        out_specs=pl.BlockSpec((t_block, b_block, output_dim), lambda b, t: (t, b, 0)),
        scratch_shapes=[pltpu.VMEM((b_block, output_dim), jnp.float32)],
        compiler_params=pltpu.CompilerParams(
            dimension_semantics=("parallel", "arbitrary"),   # batch-parallel (2 TCs on v7x),
            vmem_limit_bytes=vmem_limit,                     # time serial (recurrence)
        ),
    )(x2, wt, b2)

    # Strip time / batch padding.
    return out[:n_steps, :B, :]


if __name__ == "__main__":
    input_dim, output_dim = 32, 16
    batch, seq = 2, 4                  # x per step is (batch, seq, input_dim) -> B = 8 rows
    B = batch * seq
    n_steps = 40                       # 3 time blocks of 16 (last one padded)
    decay = 0.8

    key = jax.random.PRNGKey(0)
    kx, kw, kb = jax.random.split(key, 3)

    # Deterministic synthetic parameters (shapes from nn.Linear(input_dim, output_dim)).
    weight = jax.random.normal(kw, (output_dim, input_dim), dtype=jnp.float32) * 0.1
    bias = jax.random.normal(kb, (output_dim,), dtype=jnp.float32) * 0.1

    # Per-step inputs.
    xs = jax.random.normal(kx, (n_steps, batch, seq, input_dim), dtype=jnp.float32)

    # One-time parameter prep, then a single fused kernel call over all timesteps.
    wt, b2 = prepare_readout_params(weight, bias)
    mems = readout_forward_all_steps(xs, wt, b2, decay=decay, t_block=16)
    mems = jax.block_until_ready(mems)

    # Pure-JAX reference: same bf16 matmul operands / f32 accumulation as the kernel,
    # recurrence carried in f32 exactly like the module.
    x_r = xs.reshape(n_steps, -1, input_dim).astype(jnp.bfloat16)
    w_r = weight.T.astype(jnp.bfloat16)
    mem = jnp.zeros((B, output_dim), jnp.float32)
    refs = []
    for step in range(n_steps):
        y = jnp.dot(x_r[step], w_r, preferred_element_type=jnp.float32) + bias
        mem = decay * mem + y
        refs.append(mem)
    ref = jnp.stack(refs)

    assert mems.shape == (n_steps, B, output_dim)
    err = float(jnp.max(jnp.abs(mems - ref)))
    assert jnp.allclose(mems, ref, atol=1e-4, rtol=1e-4), f"mismatch vs reference: {err}"
    print("KERNEL_OK")
</pallas_src>

<mosaic_0001>
module attributes {stable_mosaic.version = 11 : i64} {
  func.func @_readout_block_kernel(%arg0: i32, %arg1: i32, %arg2: memref<16x16x32xbf16, #tpu.memory_space<vmem>>, %arg3: memref<32x16xbf16, #tpu.memory_space<vmem>>, %arg4: memref<1x16xf32, #tpu.memory_space<vmem>>, %arg5: memref<16x16x16xf32, #tpu.memory_space<vmem>>, %arg6: memref<16x16xf32, #tpu.memory_space<vmem>>) attributes {dimension_semantics = [#tpu.dimension_semantics<parallel>, #tpu.dimension_semantics<arbitrary>], iteration_bounds = array<i64: 1, 3>, scalar_prefetch = 0 : i64, scratch_operands = 1 : i64, tpu.core_type = #tpu.core_type<tc>, window_params = [{transform_indices = @transform_0, window_bounds = array<i64: 16, 16, 32>}, {pipeline_mode = #tpu.pipeline_mode<synchronous>, transform_indices = @transform_1, window_bounds = array<i64: 32, 16>}, {pipeline_mode = #tpu.pipeline_mode<synchronous>, transform_indices = @transform_2, window_bounds = array<i64: 1, 16>}, {transform_indices = @transform_3, window_bounds = array<i64: 16, 16, 16>}]} {
    %c0_i32 = arith.constant 0 : i32
    %0 = arith.cmpi eq, %arg1, %c0_i32 : i32
    %1 = arith.extui %0 : i1 to i32
    %c0_i32_0 = arith.constant 0 : i32
    %2 = arith.cmpi ne, %1, %c0_i32_0 : i32
    scf.if %2 {
      %cst_60 = arith.constant 0.000000e+00 : f32
      %142 = vector.broadcast %cst_60 : f32 to vector<16x16xf32>
      %c0_61 = arith.constant 0 : index
      %c0_62 = arith.constant 0 : index
      %143 = vector.load %arg6[%c0_61, %c0_62] : memref<16x16xf32, #tpu.memory_space<vmem>>, vector<16x16xf32>
      tpu.vector_store %arg6[%c0_61, %c0_62], %142 {strides = array<i32>} : memref<16x16xf32, #tpu.memory_space<vmem>>, vector<16x16xf32>,
    } else {
    }
    %c0 = arith.constant 0 : index
    %c0_1 = arith.constant 0 : index
    %c0_2 = arith.constant 0 : index
    %3 = vector.load %arg2[%c0, %c0_1, %c0_2] : memref<16x16x32xbf16, #tpu.memory_space<vmem>>, vector<16x16x32xbf16>
    %4 = vector.shape_cast %3 : vector<16x16x32xbf16> to vector<256x32xbf16>
    %c0_3 = arith.constant 0 : index
    %c0_4 = arith.constant 0 : index
    %5 = vector.load %arg3[%c0_3, %c0_4] : memref<32x16xbf16, #tpu.memory_space<vmem>>, vector<32x16xbf16>
    %cst = arith.constant dense<0.000000e+00> : vector<256x16xf32>
    %6 = tpu.matmul %4, %5, %cst {dimension_numbers = #tpu.dot_dimension_numbers<[1], [0], [0], [1], [0, 0, 1, 1], [], []>} : vector<256x32xbf16>, vector<32x16xbf16>, vector<256x16xf32> -> vector<256x16xf32>
    %7 = vector.shape_cast %6 : vector<256x16xf32> to vector<16x16x16xf32>
    %c0_5 = arith.constant 0 : index
    %c0_6 = arith.constant 0 : index
    %8 = vector.load %arg4[%c0_5, %c0_6] : memref<1x16xf32, #tpu.memory_space<vmem>>, vector<1x16xf32>
    %9 = vector.shape_cast %8 : vector<1x16xf32> to vector<1x1x16xf32>
    %10 = vector.broadcast %9 : vector<1x1x16xf32> to vector<16x16x16xf32>
    %11 = arith.addf %7, %10 : vector<16x16x16xf32>
    %c0_7 = arith.constant 0 : index
    %c0_8 = arith.constant 0 : index
    %12 = vector.load %arg6[%c0_7, %c0_8] : memref<16x16xf32, #tpu.memory_space<vmem>>, vector<16x16xf32>
    %cst_9 = arith.constant 8.000000e-01 : f32
    %13 = vector.broadcast %cst_9 : f32 to vector<16x16xf32>
    %14 = arith.mulf %13, %12 : vector<16x16xf32>
    %15 = vector.extract_strided_slice %11 {offsets = [0, 0, 0], sizes = [1, 16, 16], strides = [1, 1, 1]} : vector<16x16x16xf32> to vector<1x16x16xf32>
    %16 = vector.shape_cast %15 : vector<1x16x16xf32> to vector<16x16xf32>
    %17 = arith.addf %14, %16 : vector<16x16xf32>
    %c0_10 = arith.constant 0 : index
    %c0_11 = arith.constant 0 : index
    %c0_12 = arith.constant 0 : index
    %18 = vector.load %arg5[%c0_10, %c0_11, %c0_12] : memref<16x16x16xf32, #tpu.memory_space<vmem>>, vector<1x16x16xf32>
    %19 = vector.shape_cast %18 : vector<1x16x16xf32> to vector<16x16xf32>
    %20 = vector.shape_cast %17 : vector<16x16xf32> to vector<1x16x16xf32>
    tpu.vector_store %arg5[%c0_10, %c0_11, %c0_12], %20 {strides = array<i32>} : memref<16x16x16xf32, #tpu.memory_space<vmem>>, vector<1x16x16xf32>,
    %cst_13 = arith.constant 8.000000e-01 : f32
    %21 = vector.broadcast %cst_13 : f32 to vector<16x16xf32>
    %22 = arith.mulf %21, %17 : vector<16x16xf32>
    %23 = vector.extract_strided_slice %11 {offsets = [1, 0, 0], sizes = [1, 16, 16], strides = [1, 1, 1]} : vector<16x16x16xf32> to vector<1x16x16xf32>
    %24 = vector.shape_cast %23 : vector<1x16x16xf32> to vector<16x16xf32>
    %25 = arith.addf %22, %24 : vector<16x16xf32>
    %c1 = arith.constant 1 : index
    %c0_14 = arith.constant 0 : index
    %c0_15 = arith.constant 0 : index
    %26 = vector.load %arg5[%c1, %c0_14, %c0_15] : memref<16x16x16xf32, #tpu.memory_space<vmem>>, vector<1x16x16xf32>
    %27 = vector.shape_cast %26 : vector<1x16x16xf32> to vector<16x16xf32>
    %28 = vector.shape_cast %25 : vector<16x16xf32> to vector<1x16x16xf32>
    tpu.vector_store %arg5[%c1, %c0_14, %c0_15], %28 {strides = array<i32>} : memref<16x16x16xf32, #tpu.memory_space<vmem>>, vector<1x16x16xf32>,
    %cst_16 = arith.constant 8.000000e-01 : f32
    %29 = vector.broadcast %cst_16 : f32 to vector<16x16xf32>
    %30 = arith.mulf %29, %25 : vector<16x16xf32>
    %31 = vector.extract_strided_slice %11 {offsets = [2, 0, 0], sizes = [1, 16, 16], strides = [1, 1, 1]} : vector<16x16x16xf32> to vector<1x16x16xf32>
    %32 = vector.shape_cast %31 : vector<1x16x16xf32> to vector<16x16xf32>
    %33 = arith.addf %30, %32 : vector<16x16xf32>
    %c2 = arith.constant 2 : index
    %c0_17 = arith.constant 0 : index
    %c0_18 = arith.constant 0 : index
    %34 = vector.load %arg5[%c2, %c0_17, %c0_18] : memref<16x16x16xf32, #tpu.memory_space<vmem>>, vector<1x16x16xf32>
    %35 = vector.shape_cast %34 : vector<1x16x16xf32> to vector<16x16xf32>
    %36 = vector.shape_cast %33 : vector<16x16xf32> to vector<1x16x16xf32>
    tpu.vector_store %arg5[%c2, %c0_17, %c0_18], %36 {strides = array<i32>} : memref<16x16x16xf32, #tpu.memory_space<vmem>>, vector<1x16x16xf32>,
    %cst_19 = arith.constant 8.000000e-01 : f32
    %37 = vector.broadcast %cst_19 : f32 to vector<16x16xf32>
    %38 = arith.mulf %37, %33 : vector<16x16xf32>
    %39 = vector.extract_strided_slice %11 {offsets = [3, 0, 0], sizes = [1, 16, 16], strides = [1, 1, 1]} : vector<16x16x16xf32> to vector<1x16x16xf32>
    %40 = vector.shape_cast %39 : vector<1x16x16xf32> to vector<16x16xf32>
    %41 = arith.addf %38, %40 : vector<16x16xf32>
    %c3 = arith.constant 3 : index
    %c0_20 = arith.constant 0 : index
    %c0_21 = arith.constant 0 : index
    %42 = vector.load %arg5[%c3, %c0_20, %c0_21] : memref<16x16x16xf32, #tpu.memory_space<vmem>>, vector<1x16x16xf32>
    %43 = vector.shape_cast %42 : vector<1x16x16xf32> to vector<16x16xf32>
    %44 = vector.shape_cast %41 : vector<16x16xf32> to vector<1x16x16xf32>
    tpu.vector_store %arg5[%c3, %c0_20, %c0_21], %44 {strides = array<i32>} : memref<16x16x16xf32, #tpu.memory_space<vmem>>, vector<1x16x16xf32>,
    %cst_22 = arith.constant 8.000000e-01 : f32
    %45 = vector.broadcast %cst_22 : f32 to vector<16x16xf32>
    %46 = arith.mulf %45, %41 : vector<16x16xf32>
    %47 = vector.extract_strided_slice %11 {offsets = [4, 0, 0], sizes = [1, 16, 16], strides = [1, 1, 1]} : vector<16x16x16xf32> to vector<1x16x16xf32>
    %48 = vector.shape_cast %47 : vector<1x16x16xf32> to vector<16x16xf32>
    %49 = arith.addf %46, %48 : vector<16x16xf32>
    %c4 = arith.constant 4 : index
    %c0_23 = arith.constant 0 : index
    %c0_24 = arith.constant 0 : index
    %50 = vector.load %arg5[%c4, %c0_23, %c0_24] : memref<16x16x16xf32, #tpu.memory_space<vmem>>, vector<1x16x16xf32>
    %51 = vector.shape_cast %50 : vector<1x16x16xf32> to vector<16x16xf32>
    %52 = vector.shape_cast %49 : vector<16x16xf32> to vector<1x16x16xf32>
    tpu.vector_store %arg5[%c4, %c0_23, %c0_24], %52 {strides = array<i32>} : memref<16x16x16xf32, #tpu.memory_space<vmem>>, vector<1x16x16xf32>,
    %cst_25 = arith.constant 8.000000e-01 : f32
    %53 = vector.broadcast %cst_25 : f32 to vector<16x16xf32>
    %54 = arith.mulf %53, %49 : vector<16x16xf32>
    %55 = vector.extract_strided_slice %11 {offsets = [5, 0, 0], sizes = [1, 16, 16], strides = [1, 1, 1]} : vector<16x16x16xf32> to vector<1x16x16xf32>
    %56 = vector.shape_cast %55 : vector<1x16x16xf32> to vector<16x16xf32>
    %57 = arith.addf %54, %56 : vector<16x16xf32>
    %c5 = arith.constant 5 : index
    %c0_26 = arith.constant 0 : index
    %c0_27 = arith.constant 0 : index
    %58 = vector.load %arg5[%c5, %c0_26, %c0_27] : memref<16x16x16xf32, #tpu.memory_space<vmem>>, vector<1x16x16xf32>
    %59 = vector.shape_cast %58 : vector<1x16x16xf32> to vector<16x16xf32>
    %60 = vector.shape_cast %57 : vector<16x16xf32> to vector<1x16x16xf32>
    tpu.vector_store %arg5[%c5, %c0_26, %c0_27], %60 {strides = array<i32>} : memref<16x16x16xf32, #tpu.memory_space<vmem>>, vector<1x16x16xf32>,
    %cst_28 = arith.constant 8.000000e-01 : f32
    %61 = vector.broadcast %cst_28 : f32 to vector<16x16xf32>
    %62 = arith.mulf %61, %57 : vector<16x16xf32>
    %63 = vector.extract_strided_slice %11 {offsets = [6, 0, 0], sizes = [1, 16, 16], strides = [1, 1, 1]} : vector<16x16x16xf32> to vector<1x16x16xf32>
    %64 = vector.shape_cast %63 : vector<1x16x16xf32> to vector<16x16xf32>
    %65 = arith.addf %62, %64 : vector<16x16xf32>
    %c6 = arith.constant 6 : index
    %c0_29 = arith.constant 0 : index
    %c0_30 = arith.constant 0 : index
    %66 = vector.load %arg5[%c6, %c0_29, %c0_30] : memref<16x16x16xf32, #tpu.memory_space<vmem>>, vector<1x16x16xf32>
    %67 = vector.shape_cast %66 : vector<1x16x16xf32> to vector<16x16xf32>
    %68 = vector.shape_cast %65 : vector<16x16xf32> to vector<1x16x16xf32>
    tpu.vector_store %arg5[%c6, %c0_29, %c0_30], %68 {strides = array<i32>} : memref<16x16x16xf32, #tpu.memory_space<vmem>>, vector<1x16x16xf32>,
    %cst_31 = arith.constant 8.000000e-01 : f32
    %69 = vector.broadcast %cst_31 : f32 to vector<16x16xf32>
    %70 = arith.mulf %69, %65 : vector<16x16xf32>
    %71 = vector.extract_strided_slice %11 {offsets = [7, 0, 0], sizes = [1, 16, 16], strides = [1, 1, 1]} : vector<16x16x16xf32> to vector<1x16x16xf32>
    %72 = vector.shape_cast %71 : vector<1x16x16xf32> to vector<16x16xf32>
    %73 = arith.addf %70, %72 : vector<16x16xf32>
    %c7 = arith.constant 7 : index
    %c0_32 = arith.constant 0 : index
    %c0_33 = arith.constant 0 : index
    %74 = vector.load %arg5[%c7, %c0_32, %c0_33] : memref<16x16x16xf32, #tpu.memory_space<vmem>>, vector<1x16x16xf32>
    %75 = vector.shape_cast %74 : vector<1x16x16xf32> to vector<16x16xf32>
    %76 = vector.shape_cast %73 : vector<16x16xf32> to vector<1x16x16xf32>
    tpu.vector_store %arg5[%c7, %c0_32, %c0_33], %76 {strides = array<i32>} : memref<16x16x16xf32, #tpu.memory_space<vmem>>, vector<1x16x16xf32>,
    %cst_34 = arith.constant 8.000000e-01 : f32
    %77 = vector.broadcast %cst_34 : f32 to vector<16x16xf32>
    %78 = arith.mulf %77, %73 : vector<16x16xf32>
    %79 = vector.extract_strided_slice %11 {offsets = [8, 0, 0], sizes = [1, 16, 16], strides = [1, 1, 1]} : vector<16x16x16xf32> to vector<1x16x16xf32>
    %80 = vector.shape_cast %79 : vector<1x16x16xf32> to vector<16x16xf32>
    %81 = arith.addf %78, %80 : vector<16x16xf32>
    %c8 = arith.constant 8 : index
    %c0_35 = arith.constant 0 : index
    %c0_36 = arith.constant 0 : index
    %82 = vector.load %arg5[%c8, %c0_35, %c0_36] : memref<16x16x16xf32, #tpu.memory_space<vmem>>, vector<1x16x16xf32>
    %83 = vector.shape_cast %82 : vector<1x16x16xf32> to vector<16x16xf32>
    %84 = vector.shape_cast %81 : vector<16x16xf32> to vector<1x16x16xf32>
    tpu.vector_store %arg5[%c8, %c0_35, %c0_36], %84 {strides = array<i32>} : memref<16x16x16xf32, #tpu.memory_space<vmem>>, vector<1x16x16xf32>,
    %cst_37 = arith.constant 8.000000e-01 : f32
    %85 = vector.broadcast %cst_37 : f32 to vector<16x16xf32>
    %86 = arith.mulf %85, %81 : vector<16x16xf32>
    %87 = vector.extract_strided_slice %11 {offsets = [9, 0, 0], sizes = [1, 16, 16], strides = [1, 1, 1]} : vector<16x16x16xf32> to vector<1x16x16xf32>
    %88 = vector.shape_cast %87 : vector<1x16x16xf32> to vector<16x16xf32>
    %89 = arith.addf %86, %88 : vector<16x16xf32>
    %c9 = arith.constant 9 : index
    %c0_38 = arith.constant 0 : index
    %c0_39 = arith.constant 0 : index
    %90 = vector.load %arg5[%c9, %c0_38, %c0_39] : memref<16x16x16xf32, #tpu.memory_space<vmem>>, vector<1x16x16xf32>
    %91 = vector.shape_cast %90 : vector<1x16x16xf32> to vector<16x16xf32>
    %92 = vector.shape_cast %89 : vector<16x16xf32> to vector<1x16x16xf32>
    tpu.vector_store %arg5[%c9, %c0_38, %c0_39], %92 {strides = array<i32>} : memref<16x16x16xf32, #tpu.memory_space<vmem>>, vector<1x16x16xf32>,
    %cst_40 = arith.constant 8.000000e-01 : f32
    %93 = vector.broadcast %cst_40 : f32 to vector<16x16xf32>
    %94 = arith.mulf %93, %89 : vector<16x16xf32>
    %95 = vector.extract_strided_slice %11 {offsets = [10, 0, 0], sizes = [1, 16, 16], strides = [1, 1, 1]} : vector<16x16x16xf32> to vector<1x16x16xf32>
    %96 = vector.shape_cast %95 : vector<1x16x16xf32> to vector<16x16xf32>
    %97 = arith.addf %94, %96 : vector<16x16xf32>
    %c10 = arith.constant 10 : index
    %c0_41 = arith.constant 0 : index
    %c0_42 = arith.constant 0 : index
    %98 = vector.load %arg5[%c10, %c0_41, %c0_42] : memref<16x16x16xf32, #tpu.memory_space<vmem>>, vector<1x16x16xf32>
    %99 = vector.shape_cast %98 : vector<1x16x16xf32> to vector<16x16xf32>
    %100 = vector.shape_cast %97 : vector<16x16xf32> to vector<1x16x16xf32>
    tpu.vector_store %arg5[%c10, %c0_41, %c0_42], %100 {strides = array<i32>} : memref<16x16x16xf32, #tpu.memory_space<vmem>>, vector<1x16x16xf32>,
    %cst_43 = arith.constant 8.000000e-01 : f32
    %101 = vector.broadcast %cst_43 : f32 to vector<16x16xf32>
    %102 = arith.mulf %101, %97 : vector<16x16xf32>
    %103 = vector.extract_strided_slice %11 {offsets = [11, 0, 0], sizes = [1, 16, 16], strides = [1, 1, 1]} : vector<16x16x16xf32> to vector<1x16x16xf32>
    %104 = vector.shape_cast %103 : vector<1x16x16xf32> to vector<16x16xf32>
    %105 = arith.addf %102, %104 : vector<16x16xf32>
    %c11 = arith.constant 11 : index
    %c0_44 = arith.constant 0 : index
    %c0_45 = arith.constant 0 : index
    %106 = vector.load %arg5[%c11, %c0_44, %c0_45] : memref<16x16x16xf32, #tpu.memory_space<vmem>>, vector<1x16x16xf32>
    %107 = vector.shape_cast %106 : vector<1x16x16xf32> to vector<16x16xf32>
    %108 = vector.shape_cast %105 : vector<16x16xf32> to vector<1x16x16xf32>
    tpu.vector_store %arg5[%c11, %c0_44, %c0_45], %108 {strides = array<i32>} : memref<16x16x16xf32, #tpu.memory_space<vmem>>, vector<1x16x16xf32>,
    %cst_46 = arith.constant 8.000000e-01 : f32
    %109 = vector.broadcast %cst_46 : f32 to vector<16x16xf32>
    %110 = arith.mulf %109, %105 : vector<16x16xf32>
    %111 = vector.extract_strided_slice %11 {offsets = [12, 0, 0], sizes = [1, 16, 16], strides = [1, 1, 1]} : vector<16x16x16xf32> to vector<1x16x16xf32>
    %112 = vector.shape_cast %111 : vector<1x16x16xf32> to vector<16x16xf32>
    %113 = arith.addf %110, %112 : vector<16x16xf32>
    %c12 = arith.constant 12 : index
    %c0_47 = arith.constant 0 : index
    %c0_48 = arith.constant 0 : index
    %114 = vector.load %arg5[%c12, %c0_47, %c0_48] : memref<16x16x16xf32, #tpu.memory_space<vmem>>, vector<1x16x16xf32>
    %115 = vector.shape_cast %114 : vector<1x16x16xf32> to vector<16x16xf32>
    %116 = vector.shape_cast %113 : vector<16x16xf32> to vector<1x16x16xf32>
    tpu.vector_store %arg5[%c12, %c0_47, %c0_48], %116 {strides = array<i32>} : memref<16x16x16xf32, #tpu.memory_space<vmem>>, vector<1x16x16xf32>,
    %cst_49 = arith.constant 8.000000e-01 : f32
    %117 = vector.broadcast %cst_49 : f32 to vector<16x16xf32>
    %118 = arith.mulf %117, %113 : vector<16x16xf32>
    %119 = vector.extract_strided_slice %11 {offsets = [13, 0, 0], sizes = [1, 16, 16], strides = [1, 1, 1]} : vector<16x16x16xf32> to vector<1x16x16xf32>
    %120 = vector.shape_cast %119 : vector<1x16x16xf32> to vector<16x16xf32>
    %121 = arith.addf %118, %120 : vector<16x16xf32>
    %c13 = arith.constant 13 : index
    %c0_50 = arith.constant 0 : index
    %c0_51 = arith.constant 0 : index
    %122 = vector.load %arg5[%c13, %c0_50, %c0_51] : memref<16x16x16xf32, #tpu.memory_space<vmem>>, vector<1x16x16xf32>
    %123 = vector.shape_cast %122 : vector<1x16x16xf32> to vector<16x16xf32>
    %124 = vector.shape_cast %121 : vector<16x16xf32> to vector<1x16x16xf32>
    tpu.vector_store %arg5[%c13, %c0_50, %c0_51], %124 {strides = array<i32>} : memref<16x16x16xf32, #tpu.memory_space<vmem>>, vector<1x16x16xf32>,
    %cst_52 = arith.constant 8.000000e-01 : f32
    %125 = vector.broadcast %cst_52 : f32 to vector<16x16xf32>
    %126 = arith.mulf %125, %121 : vector<16x16xf32>
    %127 = vector.extract_strided_slice %11 {offsets = [14, 0, 0], sizes = [1, 16, 16], strides = [1, 1, 1]} : vector<16x16x16xf32> to vector<1x16x16xf32>
    %128 = vector.shape_cast %127 : vector<1x16x16xf32> to vector<16x16xf32>
    %129 = arith.addf %126, %128 : vector<16x16xf32>
    %c14 = arith.constant 14 : index
    %c0_53 = arith.constant 0 : index
    %c0_54 = arith.constant 0 : index
    %130 = vector.load %arg5[%c14, %c0_53, %c0_54] : memref<16x16x16xf32, #tpu.memory_space<vmem>>, vector<1x16x16xf32>
    %131 = vector.shape_cast %130 : vector<1x16x16xf32> to vector<16x16xf32>
    %132 = vector.shape_cast %129 : vector<16x16xf32> to vector<1x16x16xf32>
    tpu.vector_store %arg5[%c14, %c0_53, %c0_54], %132 {strides = array<i32>} : memref<16x16x16xf32, #tpu.memory_space<vmem>>, vector<1x16x16xf32>,
    %cst_55 = arith.constant 8.000000e-01 : f32
    %133 = vector.broadcast %cst_55 : f32 to vector<16x16xf32>
    %134 = arith.mulf %133, %129 : vector<16x16xf32>
    %135 = vector.extract_strided_slice %11 {offsets = [15, 0, 0], sizes = [1, 16, 16], strides = [1, 1, 1]} : vector<16x16x16xf32> to vector<1x16x16xf32>
    %136 = vector.shape_cast %135 : vector<1x16x16xf32> to vector<16x16xf32>
    %137 = arith.addf %134, %136 : vector<16x16xf32>
    %c15 = arith.constant 15 : index
    %c0_56 = arith.constant 0 : index
    %c0_57 = arith.constant 0 : index
    %138 = vector.load %arg5[%c15, %c0_56, %c0_57] : memref<16x16x16xf32, #tpu.memory_space<vmem>>, vector<1x16x16xf32>
    %139 = vector.shape_cast %138 : vector<1x16x16xf32> to vector<16x16xf32>
    %140 = vector.shape_cast %137 : vector<16x16xf32> to vector<1x16x16xf32>
    tpu.vector_store %arg5[%c15, %c0_56, %c0_57], %140 {strides = array<i32>} : memref<16x16x16xf32, #tpu.memory_space<vmem>>, vector<1x16x16xf32>,
    %c0_58 = arith.constant 0 : index
    %c0_59 = arith.constant 0 : index
    %141 = vector.load %arg6[%c0_58, %c0_59] : memref<16x16xf32, #tpu.memory_space<vmem>>, vector<16x16xf32>
    tpu.vector_store %arg6[%c0_58, %c0_59], %137 {strides = array<i32>} : memref<16x16xf32, #tpu.memory_space<vmem>>, vector<16x16xf32>,
    return
  }
  func.func @transform_0(%arg0: i32, %arg1: i32) -> (i32, i32, i32) {
    %c0_i32 = arith.constant 0 : i32
    %c0_i32_0 = arith.constant 0 : i32
    return %arg1, %arg0, %c0_i32 : i32, i32, i32
  }
  func.func @transform_1(%arg0: i32, %arg1: i32) -> (i32, i32) {
    %c0_i32 = arith.constant 0 : i32
    %c0_i32_0 = arith.constant 0 : i32
    %c0_i32_1 = arith.constant 0 : i32
    return %c0_i32, %c0_i32_0 : i32, i32
  }
  func.func @transform_2(%arg0: i32, %arg1: i32) -> (i32, i32) {
    %c0_i32 = arith.constant 0 : i32
    %c0_i32_0 = arith.constant 0 : i32
    %c0_i32_1 = arith.constant 0 : i32
    return %c0_i32, %c0_i32_0 : i32, i32
  }
  func.func @transform_3(%arg0: i32, %arg1: i32) -> (i32, i32, i32) {
    %c0_i32 = arith.constant 0 : i32
    %c0_i32_0 = arith.constant 0 : i32
    return %arg1, %arg0, %c0_i32 : i32, i32, i32
  }
}

</mosaic_0001>

<llo_original>
// kernel: tpu_custom_call.1
$region0: #{tpu_custom_call.1}
  #allocation0 [shape = 'u32[]', space=smem, size = 0x4, offset = 0x4, fixed_abs, tag = 'smem constant byte address 0x4 - core index']
  #allocation1 [shape = 'u32[144,128]{1,0:T(1,128)}', space=vmem, size = 0x12000, scoped, tag = 'internal scratch']
  #allocation2 [shape = 'f32[16,16]{1,0:T(8,128)}', space=vmem, size = 0x2000, scoped, tag = 'scratch operand']
  %s0 = inlined_call_operand.vmem [shape: bf16[48,16,32], index: 0, kind: input, shape index: {}]
  %s1 = inlined_call_operand.vmem [shape: bf16[32,16], index: 1, kind: input, shape index: {}]
  %s2 = inlined_call_operand.vmem [shape: f32[1,16], index: 2, kind: input, shape index: {}]
  %s3 = inlined_call_operand.vmem [shape: f32[48,16,16], index: 3, kind: output, shape index: {}]
  %s4 = sld [smem:[#allocation0]]
  $region49: #{tpu_custom_call.1} parent=0
    _
  %s6 = ssub.s32 1, %s4
  %s7 = scalar_select 0, %s6, %s4
  loop: start=0, step=1, limit=5
  $region2: #{tpu_custom_call.1} parent=0 // loop_pre_header
    _
  $region3: #{tpu_custom_call.1} parent=0 // loop_header
    %s9 = sphi 0, %s13
    %p10 = scmp.ge.s32.totalorder %s9, 5
    %s16 = sphi 0, %s28
    %s17 = sphi 0, %s24
    %s18 = sphi 0, %s16
    %s19 = sphi 0, %s17
    %s20 = sphi 0, %s18
    %s21 = sphi 0, %s19
    %s33 = sphi 0, %s35
    %s36 = sphi 0, %s33
    %s37 = sphi 0, %s36
    %s53 = sphi 0, %s37
    %s57 = sphi 0, %s57
    %s59 = sphi 0, %s57
    %s60 = sphi 0, %s59
    %s74 = sphi 0, %s60
    %s78 = sphi 0, %s78
    %s80 = sphi 0, %s78
    %s81 = sphi 0, %s80
    %s95 = sphi 0, %s81
    %s103 = sphi 0, %s105
    %s106 = sphi 0, %s103
    %s107 = sphi 0, %s106
    %s123 = sphi 0, %s107
  $region4: #{tpu_custom_call.1} parent=0 // loop_header_branch
    %12 = sbr.rel (%p10) target = $region8
  $region5: #{tpu_custom_call.1} parent=0 // loop_body
    %s14 = ssub.s32 %s9, 1
    %s15 = ssub.s32 %s9, 2
    %s22 = sadd.s32 1, %s17
    %p23 = scmp.ge.s32.totalorder %s22, 3
    %s24 = scalar_select %p23, 0, %s22
    %s25 = sadd.s32 1, %s16
    %s26 = scalar_select %p23, %s25, %s16
    %p27 = scmp.ge.s32.totalorder %s26, 1
    %s28 = scalar_select %p27, 0, %s26
    %s29 = ssub.s32 %s17, %s24
    %s30 = ssub.s32 %s16, %s28
    %s31 = sor.u32 %s29, %s30
    %p32 = scmp.eq.s32.totalorder %s31, 0
    %s34 = sadd.s32 %s33, 1
    %s35 = scalar_select %p32, %s33, %s34
    %p38 = pneg %p32
    %p39 = scmp.eq.s32.totalorder %s9, 2
    %p40 = por %p38, %p39
    %p41 = scmp.ne.s32.totalorder %s33, %s36
    %p42 = scmp.eq.s32.totalorder %s9, 0
    %p43 = por %p41, %p42
    %p44 = scmp.ne.s32.totalorder %s33, %s36
    %p45 = scmp.eq.s32.totalorder %s14, 2
    %p46 = por %p44, %p45
    %p47 = scmp.ne.s32.totalorder %s36, %s37
    %p48 = scmp.eq.s32.totalorder %s14, 0
    %p49 = por %p47, %p48
    %p50 = scmp.ne.s32.totalorder %s36, %s37
    %p51 = scmp.eq.s32.totalorder %s15, 2
    %p52 = por %p50, %p51
    %p54 = scmp.ne.s32.totalorder %s37, %s53
    %p55 = scmp.eq.s32.totalorder %s15, 0
    %p56 = por %p54, %p55
    %s58 = sadd.s32 %s57, 1
    %p61 = scmp.eq.s32.totalorder %s9, 2
    %p62 = scmp.ne.s32.totalorder %s57, %s59
    %p63 = scmp.eq.s32.totalorder %s9, 0
    %p64 = por %p62, %p63
    %p65 = scmp.ne.s32.totalorder %s57, %s59
    %p66 = scmp.eq.s32.totalorder %s14, 2
    %p67 = por %p65, %p66
    %p68 = scmp.ne.s32.totalorder %s59, %s60
    %p69 = scmp.eq.s32.totalorder %s14, 0
    %p70 = por %p68, %p69
    %p71 = scmp.ne.s32.totalorder %s59, %s60
    %p72 = scmp.eq.s32.totalorder %s15, 2
    %p73 = por %p71, %p72
    %p75 = scmp.ne.s32.totalorder %s60, %s74
    %p76 = scmp.eq.s32.totalorder %s15, 0
    %p77 = por %p75, %p76
    %s79 = sadd.s32 %s78, 1
    %p82 = scmp.eq.s32.totalorder %s9, 2
    %p83 = scmp.ne.s32.totalorder %s78, %s80
    %p84 = scmp.eq.s32.totalorder %s9, 0
    %p85 = por %p83, %p84
    %p86 = scmp.ne.s32.totalorder %s78, %s80
    %p87 = scmp.eq.s32.totalorder %s14, 2
    %p88 = por %p86, %p87
    %p89 = scmp.ne.s32.totalorder %s80, %s81
    %p90 = scmp.eq.s32.totalorder %s14, 0
    %p91 = por %p89, %p90
    %p92 = scmp.ne.s32.totalorder %s80, %s81
    %p93 = scmp.eq.s32.totalorder %s15, 2
    %p94 = por %p92, %p93
    %p96 = scmp.ne.s32.totalorder %s81, %s95
    %p97 = scmp.eq.s32.totalorder %s15, 0
    %p98 = por %p96, %p97
    %s99 = ssub.s32 %s17, %s24
    %s100 = ssub.s32 %s16, %s28
    %s101 = sor.u32 %s99, %s100
    %p102 = scmp.eq.s32.totalorder %s101, 0
    %s104 = sadd.s32 %s103, 1
    %s105 = scalar_select %p102, %s103, %s104
    %p108 = pneg %p102
    %p109 = scmp.eq.s32.totalorder %s9, 2
    %p110 = por %p108, %p109
    %p111 = scmp.ne.s32.totalorder %s103, %s106
    %p112 = scmp.eq.s32.totalorder %s9, 0
    %p113 = por %p111, %p112
    %p114 = scmp.ne.s32.totalorder %s103, %s106
    %p115 = scmp.eq.s32.totalorder %s14, 2
    %p116 = por %p114, %p115
    %p117 = scmp.ne.s32.totalorder %s106, %s107
    %p118 = scmp.eq.s32.totalorder %s14, 0
    %p119 = por %p117, %p118
    %p120 = scmp.ne.s32.totalorder %s106, %s107
    %p121 = scmp.eq.s32.totalorder %s15, 2
    %p122 = por %p120, %p121
    %p124 = scmp.ne.s32.totalorder %s107, %s123
    %p125 = scmp.eq.s32.totalorder %s15, 0
    %p126 = por %p124, %p125
    %p127 = scmp.le.s32.totalorder 1, %s9
    %p128 = scmp.lt.s32.totalorder %s9, 4
    %p129 = pnand %p127, %p128
    %p130 = pneg %p129
    // Predicated region
    $region9: #{tpu_custom_call.1} parent=5 // pred_check
      _
    $region10: #{tpu_custom_call.1} parent=5 // pred_check_branch
      %132 = sbr.rel (%p129) target = $region12
    $region11: #{tpu_custom_call.1} parent=5 // pred_region
      %s133 = ssub.s32 %s9, 1
      // Predicated region
      $region13: #{tpu_custom_call.1} parent=11 // pred_check
        %p134 = pneg %p70
      $region14: #{tpu_custom_call.1} parent=11 // pred_check_branch
        %136 = sbr.rel (%p134) target = $region16
      $region15: #{tpu_custom_call.1} parent=11 // pred_region
        _
      $region16: #{tpu_custom_call.1} parent=11 // pred_fallthru
        _
      // Predicated region
      $region17: #{tpu_custom_call.1} parent=11 // pred_check
        %p137 = pneg %p91
      $region18: #{tpu_custom_call.1} parent=11 // pred_check_branch
        %139 = sbr.rel (%p137) target = $region20
      $region19: #{tpu_custom_call.1} parent=11 // pred_region
        _
      $region20: #{tpu_custom_call.1} parent=11 // pred_fallthru
        _
    $region12: #{tpu_custom_call.1} parent=5 // pred_fallthru
      _
    %p140 = scmp.lt.s32.totalorder %s9, 3
    // Predicated region
    $region21: #{tpu_custom_call.1} parent=5 // pred_check
      %p141 = pneg %p140
    $region22: #{tpu_custom_call.1} parent=5 // pred_check_branch
      %143 = sbr.rel (%p141) target = $region24
    $region23: #{tpu_custom_call.1} parent=5 // pred_region
      // Predicated region
      $region25: #{tpu_custom_call.1} parent=23 // pred_check
        %p144 = pneg %p43
      $region26: #{tpu_custom_call.1} parent=23 // pred_check_branch
        %146 = sbr.rel (%p144) target = $region28
      $region27: #{tpu_custom_call.1} parent=23 // pred_region
        %s147 = smul.u32 16, %s17
        %s148 = smul.u32 2, %s16
        %p149 = scmp.lt.s32.totalorder %s147, 47
        %s150 = scalar_select %p149, %s147, 47
        %p151 = scmp.lt.s32.totalorder %s148, 1
        %s152 = scalar_select %p151, %s148, 1
        %s153 = smul.addr %s150, 2
        %s154 = sadd.s32 %s152, %s153
        %s155 = smul.addr %s154, 4
        %s156 = scalar_lea.vmem %s0, %s155
        %s157 = smul.u32 16, %s17
        %s158 = smul.u32 2, %s16
      $region28: #{tpu_custom_call.1} parent=23 // pred_fallthru
        _
    $region24: #{tpu_custom_call.1} parent=5 // pred_fallthru
      _
    %p159 = scmp.le.s32.totalorder 1, %s9
    %p160 = scmp.lt.s32.totalorder %s9, 4
    %p161 = pnand %p159, %p160
    %p162 = pneg %p161
    // Predicated region
    $region29: #{tpu_custom_call.1} parent=5 // pred_check
      _
    $region30: #{tpu_custom_call.1} parent=5 // pred_check_branch
      %164 = sbr.rel (%p161) target = $region32
    $region31: #{tpu_custom_call.1} parent=5 // pred_region
      %s165 = ssub.s32 %s9, 1
      %s166 = smul.u32 16, %s19
      %s167 = smul.u32 2, %s18
      %p168 = scmp.lt.s32.totalorder %s166, 47
      %s169 = scalar_select %p168, %s166, 47
      %p170 = scmp.lt.s32.totalorder %s167, 1
      %s171 = scalar_select %p170, %s167, 1
      %s172 = smul.addr %s169, 2
      %s173 = sadd.s32 %s171, %s172
      %s174 = smul.addr %s173, 4
      %s175 = scalar_lea.vmem %s0, %s174
      %p176 = pneg %p49
      %p177 = pneg %p46
      %p178 = pneg %p70
      %p179 = pneg %p67
      %p180 = pneg %p91
      %p181 = pneg %p88
      %p182 = pneg %p119
      %p183 = pneg %p116
      %s184 = smul.u32 16, %s19
      %s185 = smul.u32 2, %s18
      %p186 = scmp.lt.s32.totalorder %s184, 47
      %s187 = scalar_select %p186, %s184, 47
      %p188 = scmp.lt.s32.totalorder %s185, 1
      %s189 = scalar_select %p188, %s185, 1
      %s190 = smul.addr %s187, 2
      %s191 = sadd.s32 %s189, %s190
      %s192 = smul.addr %s191, 8
      %s193 = scalar_lea.vmem %s3, %s192
      %s194 = smul.u32 16, %s19
      %s195 = smul.u32 2, %s18
      %p196 = scmp.lt.s32.totalorder %s194, 47
      %s197 = scalar_select %p196, %s194, 47
      %p198 = scmp.lt.s32.totalorder %s195, 1
      %s199 = scalar_select %p198, %s195, 1
      %s200 = smul.addr %s197, 2
      %s201 = sadd.s32 %s199, %s200
      %s202 = smul.addr %s201, 4
      %s203 = scalar_lea.vmem %s0, %s202
      %s204 = smul.u32 16, %s19
      %s205 = smul.u32 2, %s18
      %s206 = smul.u32 16, %s19
      %s207 = smul.u32 2, %s18
      %p208 = scmp.lt.s32.totalorder %s206, 47
      %s209 = scalar_select %p208, %s206, 47
      %p210 = scmp.lt.s32.totalorder %s207, 1
      %s211 = scalar_select %p210, %s207, 1
      %s212 = smul.addr %s209, 2
      %s213 = sadd.s32 %s211, %s212
      %s214 = smul.addr %s213, 8
      %s215 = scalar_lea.vmem %s3, %s214
      %s216 = smul.u32 16, %s19
      %s217 = smul.u32 2, %s18
      %p219 = scmp.eq.s32.totalorder %s19, 0
      // Predicated region
      $region33: #{tpu_custom_call.1} parent=31 // pred_check
        %p220 = pneg %p219
      $region34: #{tpu_custom_call.1} parent=31 // pred_check_branch
        %222 = sbr.rel (%p220) target = $region36
      $region35: #{tpu_custom_call.1} parent=31 // pred_region
        %vm223 = vcmask 130048
        %224 = vst.msk [vmem:[#allocation2] sm:$0xff] %vm223, 0.0
        %225 = vst.msk [vmem:[#allocation2 + $0x8] sm:$0xff] %vm223, 0.0
      $region36: #{tpu_custom_call.1} parent=31 // pred_fallthru
        _
      %v226 = vld [vmem:[%s203] sm:$0xf]
      %v227 = vld [vmem:[%s203 + $0x4] sm:$0xf]
      %v228 = vld [vmem:[%s203 + $0x8] sm:$0xf]
      %v229 = vld [vmem:[%s203 + $0xc] sm:$0xf]
      %v230 = vld [vmem:[%s203 + $0x10] sm:$0xf]
      %v231 = vld [vmem:[%s203 + $0x14] sm:$0xf]
      %v232 = vld [vmem:[%s203 + $0x18] sm:$0xf]
      %v233 = vld [vmem:[%s203 + $0x1c] sm:$0xf]
      %v234 = vld [vmem:[%s203 + $0x20] sm:$0xf]
      %v235 = vld [vmem:[%s203 + $0x24] sm:$0xf]
      %v236 = vld [vmem:[%s203 + $0x28] sm:$0xf]
      %v237 = vld [vmem:[%s203 + $0x2c] sm:$0xf]
      %v238 = vld [vmem:[%s203 + $0x30] sm:$0xf]
      %v239 = vld [vmem:[%s203 + $0x34] sm:$0xf]
      %v240 = vld [vmem:[%s203 + $0x38] sm:$0xf]
      %v241 = vld [vmem:[%s203 + $0x3c] sm:$0xf]
      %v242 = vld [vmem:[%s203 + $0x40] sm:$0xf]
      %v243 = vld [vmem:[%s203 + $0x44] sm:$0xf]
      %v244 = vld [vmem:[%s203 + $0x48] sm:$0xf]
      %v245 = vld [vmem:[%s203 + $0x4c] sm:$0xf]
      %v246 = vld [vmem:[%s203 + $0x50] sm:$0xf]
      %v247 = vld [vmem:[%s203 + $0x54] sm:$0xf]
      %v248 = vld [vmem:[%s203 + $0x58] sm:$0xf]
      %v249 = vld [vmem:[%s203 + $0x5c] sm:$0xf]
      %v250 = vld [vmem:[%s203 + $0x60] sm:$0xf]
      %v251 = vld [vmem:[%s203 + $0x64] sm:$0xf]
      %v252 = vld [vmem:[%s203 + $0x68] sm:$0xf]
      %v253 = vld [vmem:[%s203 + $0x6c] sm:$0xf]
      %v254 = vld [vmem:[%s203 + $0x70] sm:$0xf]
      %v255 = vld [vmem:[%s203 + $0x74] sm:$0xf]
      %v256 = vld [vmem:[%s203 + $0x78] sm:$0xf]
      %v257 = vld [vmem:[%s203 + $0x7c] sm:$0xf]
      %v258 = vld [vmem:[%s1] sm:$0xf]
      %v259 = vld [vmem:[%s1 + $0x4] sm:$0xf]
      %v260 = vld [vmem:[%s1 + $0x8] sm:$0xf]
      %v261 = vld [vmem:[%s1 + $0xc] sm:$0xf]
      %v294 = vunpack.c.l.b16 %v226
      %v295 = vunpack.c.l.b16 %v227
      %v296 = vunpack.c.l.b16 %v228
      %v297 = vunpack.c.l.b16 %v229
      %v298 = vunpack.c.l.b16 %v230
      %v299 = vunpack.c.l.b16 %v231
      %v300 = vunpack.c.l.b16 %v232
      %v301 = vunpack.c.l.b16 %v233
      %v302 = vunpack.c.l.b16 %v234
      %v303 = vunpack.c.l.b16 %v235
      %v304 = vunpack.c.l.b16 %v236
      %v305 = vunpack.c.l.b16 %v237
      %v306 = vunpack.c.l.b16 %v238
      %v307 = vunpack.c.l.b16 %v239
      %v308 = vunpack.c.l.b16 %v240
      %v309 = vunpack.c.l.b16 %v241
      %v310 = vunpack.c.l.b16 %v242
      %v311 = vunpack.c.l.b16 %v243
      %v312 = vunpack.c.l.b16 %v244
      %v313 = vunpack.c.l.b16 %v245
      %v314 = vunpack.c.l.b16 %v246
      %v315 = vunpack.c.l.b16 %v247
      %v316 = vunpack.c.l.b16 %v248
      %v317 = vunpack.c.l.b16 %v249
      %v318 = vunpack.c.l.b16 %v250
      %v319 = vunpack.c.l.b16 %v251
      %v320 = vunpack.c.l.b16 %v252
      %v321 = vunpack.c.l.b16 %v253
      %v322 = vunpack.c.l.b16 %v254
      %v323 = vunpack.c.l.b16 %v255
      %v324 = vunpack.c.l.b16 %v256
      %v325 = vunpack.c.l.b16 %v257
      %v326 = vpack.c.b16 %v295, %v294
      %v327 = vpack.c.b16 %v297, %v296
      %v328 = vpack.c.b16 %v299, %v298
      %v329 = vpack.c.b16 %v301, %v300
      %v330 = vpack.c.b16 %v303, %v302
      %v331 = vpack.c.b16 %v305, %v304
      %v332 = vpack.c.b16 %v307, %v306
      %v333 = vpack.c.b16 %v309, %v308
      %v334 = vpack.c.b16 %v311, %v310
      %v335 = vpack.c.b16 %v313, %v312
      %v336 = vpack.c.b16 %v315, %v314
      %v337 = vpack.c.b16 %v317, %v316
      %v338 = vpack.c.b16 %v319, %v318
      %v339 = vpack.c.b16 %v321, %v320
      %v340 = vpack.c.b16 %v323, %v322
      %v341 = vpack.c.b16 %v325, %v324
      %v346 = vunpack.c.l.b16 %v258
      %v347 = vunpack.c.l.b16 %v259
      %v348 = vunpack.c.l.b16 %v260
      %v349 = vunpack.c.l.b16 %v261
      %v350 = vpack.c.b16 %v347, %v346
      %v351 = vpack.c.b16 %v349, %v348
      %vm354 = vcmask 261120
      %v356 = vsel %vm354, %v326, 0
      %v359 = vsel %vm354, %v327, 0
      %v362 = vsel %vm354, %v328, 0
      %v365 = vsel %vm354, %v329, 0
      %v368 = vsel %vm354, %v330, 0
      %v371 = vsel %vm354, %v331, 0
      %v374 = vsel %vm354, %v332, 0
      %v377 = vsel %vm354, %v333, 0
      %v380 = vsel %vm354, %v334, 0
      %v383 = vsel %vm354, %v335, 0
      %v386 = vsel %vm354, %v336, 0
      %v389 = vsel %vm354, %v337, 0
      %v392 = vsel %vm354, %v338, 0
      %v395 = vsel %vm354, %v339, 0
      %v398 = vsel %vm354, %v340, 0
      %v401 = vsel %vm354, %v341, 0
      %403 = vmatprep.subr.bf16.mxu0 0
      %404 = vmatpush1.bf16.msra.mxu0 %v350
      %405 = vmatprep.subr.bf16.mxu0 0
      %406 = vmatpush1.bf16.msra.mxu0 %v351
      %407 = vmatprep.subr.bf16.mxu0 0
      %408 = vmatpush1.bf16.msra.mxu0 0
      %409 = vmatprep.subr.bf16.mxu0 0
      %410 = vmatpush1.bf16.msra.mxu0 0
      %411 = vmatprep.subr.bf16.mxu0 0
      %412 = vmatpush1.bf16.msra.mxu0 0
      %413 = vmatprep.subr.bf16.mxu0 0
      %414 = vmatpush1.bf16.msra.mxu0 0
      %415 = vmatprep.subr.bf16.mxu0 0
      %416 = vmatpush1.bf16.msra.mxu0 0
      %417 = vmatprep.subr.bf16.mxu0 0
      %418 = vmatpush1.bf16.msra.mxu0 0
      %419 = vmatprep.subr.bf16.mxu0 0
      %420 = vmatpush1.bf16.msra.mxu0 0
      %421 = vmatprep.subr.bf16.mxu0 0
      %422 = vmatpush1.bf16.msra.mxu0 0
      %423 = vmatprep.subr.bf16.mxu0 0
      %424 = vmatpush1.bf16.msra.mxu0 0
      %425 = vmatprep.subr.bf16.mxu0 0
      %426 = vmatpush1.bf16.msra.mxu0 0
      %427 = vmatprep.subr.bf16.mxu0 0
      %428 = vmatpush1.bf16.msra.mxu0 0
      %429 = vmatprep.subr.bf16.mxu0 0
      %430 = vmatpush1.bf16.msra.mxu0 0
      %431 = vmatprep.subr.bf16.mxu0 0
      %432 = vmatpush1.bf16.msra.mxu0 0
      %433 = vmatprep.subr.bf16.mxu0 0
      %434 = vmatpush1.bf16.msra.mxu0 0
      %435 = vmatprep.mubr.bf16.mxu0 0
      %436 = vmatmul.mubr.bf16.gmra.mrb[0].mxu0 %v356
      %v437 = vpop.f32.mrb[0].mxu0
      %v438 = vadd.f32 0.0, %v437
      %v439 = vpop.f32.mrb[0].mxu0
      %v440 = vpop.f32.mrb[0].mxu0
      %v441 = vadd.f32 0.0, %v440
      %v442 = vpop.f32.mrb[0].mxu0
      %443 = vmatprep.mubr.bf16.mxu0 0
      %444 = vmatmul.mubr.bf16.gmra.mrb[0].mxu0 %v359
      %v445 = vpop.f32.mrb[0].mxu0
      %v446 = vadd.f32 0.0, %v445
      %v447 = vpop.f32.mrb[0].mxu0
      %v448 = vpop.f32.mrb[0].mxu0
      %v449 = vadd.f32 0.0, %v448
      %v450 = vpop.f32.mrb[0].mxu0
      %451 = vmatprep.mubr.bf16.mxu0 0
      %452 = vmatmul.mubr.bf16.gmra.mrb[0].mxu0 %v362
      %v453 = vpop.f32.mrb[0].mxu0
      %v454 = vadd.f32 0.0, %v453
      %v455 = vpop.f32.mrb[0].mxu0
      %v456 = vpop.f32.mrb[0].mxu0
      %v457 = vadd.f32 0.0, %v456
      %v458 = vpop.f32.mrb[0].mxu0
      %459 = vmatprep.mubr.bf16.mxu0 0
      %460 = vmatmul.mubr.bf16.gmra.mrb[0].mxu0 %v365
      %v461 = vpop.f32.mrb[0].mxu0
      %v462 = vadd.f32 0.0, %v461
      %v463 = vpop.f32.mrb[0].mxu0
      %v464 = vpop.f32.mrb[0].mxu0
      %v465 = vadd.f32 0.0, %v464
      %v466 = vpop.f32.mrb[0].mxu0
      %467 = vmatprep.mubr.bf16.mxu0 0
      %468 = vmatmul.mubr.bf16.gmra.mrb[0].mxu0 %v368
      %v469 = vpop.f32.mrb[0].mxu0
      %v470 = vadd.f32 0.0, %v469
      %v471 = vpop.f32.mrb[0].mxu0
      %v472 = vpop.f32.mrb[0].mxu0
      %v473 = vadd.f32 0.0, %v472
      %v474 = vpop.f32.mrb[0].mxu0
      %475 = vmatprep.mubr.bf16.mxu0 0
      %476 = vmatmul.mubr.bf16.gmra.mrb[0].mxu0 %v371
      %v477 = vpop.f32.mrb[0].mxu0
      %v478 = vadd.f32 0.0, %v477
      %v479 = vpop.f32.mrb[0].mxu0
      %v480 = vpop.f32.mrb[0].mxu0
      %v481 = vadd.f32 0.0, %v480
      %v482 = vpop.f32.mrb[0].mxu0
      %483 = vmatprep.mubr.bf16.mxu0 0
      %484 = vmatmul.mubr.bf16.gmra.mrb[0].mxu0 %v374
      %v485 = vpop.f32.mrb[0].mxu0
      %v486 = vadd.f32 0.0, %v485
      %v487 = vpop.f32.mrb[0].mxu0
      %v488 = vpop.f32.mrb[0].mxu0
      %v489 = vadd.f32 0.0, %v488
      %v490 = vpop.f32.mrb[0].mxu0
      %491 = vmatprep.mubr.bf16.mxu0 0
      %492 = vmatmul.mubr.bf16.gmra.mrb[0].mxu0 %v377
      %v493 = vpop.f32.mrb[0].mxu0
      %v494 = vadd.f32 0.0, %v493
      %v495 = vpop.f32.mrb[0].mxu0
      %v496 = vpop.f32.mrb[0].mxu0
      %v497 = vadd.f32 0.0, %v496
      %v498 = vpop.f32.mrb[0].mxu0
      %499 = vmatprep.mubr.bf16.mxu0 0
      %500 = vmatmul.mubr.bf16.gmra.mrb[0].mxu0 %v380
      %v501 = vpop.f32.mrb[0].mxu0
      %v502 = vadd.f32 0.0, %v501
      %v503 = vpop.f32.mrb[0].mxu0
      %v504 = vpop.f32.mrb[0].mxu0
      %v505 = vadd.f32 0.0, %v504
      %v506 = vpop.f32.mrb[0].mxu0
      %507 = vmatprep.mubr.bf16.mxu0 0
      %508 = vmatmul.mubr.bf16.gmra.mrb[0].mxu0 %v383
      %v509 = vpop.f32.mrb[0].mxu0
      %v510 = vadd.f32 0.0, %v509
      %v511 = vpop.f32.mrb[0].mxu0
      %v512 = vpop.f32.mrb[0].mxu0
      %v513 = vadd.f32 0.0, %v512
      %v514 = vpop.f32.mrb[0].mxu0
      %515 = vmatprep.mubr.bf16.mxu0 0
      %516 = vmatmul.mubr.bf16.gmra.mrb[0].mxu0 %v386
      %v517 = vpop.f32.mrb[0].mxu0
      %v518 = vadd.f32 0.0, %v517
      %v519 = vpop.f32.mrb[0].mxu0
      %v520 = vpop.f32.mrb[0].mxu0
      %v521 = vadd.f32 0.0, %v520
      %v522 = vpop.f32.mrb[0].mxu0
      %523 = vmatprep.mubr.bf16.mxu0 0
      %524 = vmatmul.mubr.bf16.gmra.mrb[0].mxu0 %v389
      %v525 = vpop.f32.mrb[0].mxu0
      %v526 = vadd.f32 0.0, %v525
      %v527 = vpop.f32.mrb[0].mxu0
      %v528 = vpop.f32.mrb[0].mxu0
      %v529 = vadd.f32 0.0, %v528
      %v530 = vpop.f32.mrb[0].mxu0
      %531 = vmatprep.mubr.bf16.mxu0 0
      %532 = vmatmul.mubr.bf16.gmra.mrb[0].mxu0 %v392
      %v533 = vpop.f32.mrb[0].mxu0
      %v534 = vadd.f32 0.0, %v533
      %v535 = vpop.f32.mrb[0].mxu0
      %v536 = vpop.f32.mrb[0].mxu0
      %v537 = vadd.f32 0.0, %v536
      %v538 = vpop.f32.mrb[0].mxu0
      %539 = vmatprep.mubr.bf16.mxu0 0
      %540 = vmatmul.mubr.bf16.gmra.mrb[0].mxu0 %v395
      %v541 = vpop.f32.mrb[0].mxu0
      %v542 = vadd.f32 0.0, %v541
      %v543 = vpop.f32.mrb[0].mxu0
      %v544 = vpop.f32.mrb[0].mxu0
      %v545 = vadd.f32 0.0, %v544
      %v546 = vpop.f32.mrb[0].mxu0
      %547 = vmatprep.mubr.bf16.mxu0 0
      %548 = vmatmul.mubr.bf16.gmra.mrb[0].mxu0 %v398
      %v549 = vpop.f32.mrb[0].mxu0
      %v550 = vadd.f32 0.0, %v549
      %v551 = vpop.f32.mrb[0].mxu0
      %v552 = vpop.f32.mrb[0].mxu0
      %v553 = vadd.f32 0.0, %v552
      %v554 = vpop.f32.mrb[0].mxu0
      %555 = vmatprep.mubr.bf16.mxu0 0
      %556 = vmatmul.mubr.bf16.gmra.mrb[0].mxu0 %v401
      %v557 = vpop.f32.mrb[0].mxu0
      %v558 = vadd.f32 0.0, %v557
      %v559 = vpop.f32.mrb[0].mxu0
      %v560 = vpop.f32.mrb[0].mxu0
      %v561 = vadd.f32 0.0, %v560
      %v562 = vpop.f32.mrb[0].mxu0
      %563 = vdwg.mxu0
      %v564 = vld [vmem:[%s2] sm:$0x1]
      %v566 = vlaneseq
      %v567 = vshrl.u32 %v566, 7
      %v568 = vsub.s32 0, %v567
      %v569 = vrot.slane %v564, %v568
      %v571 = vadd.f32 %v438, %v569
      %v572 = vadd.f32 %v441, %v569
      %v573 = vadd.f32 %v446, %v569
      %v574 = vadd.f32 %v449, %v569
      %v575 = vadd.f32 %v454, %v569
      %v576 = vadd.f32 %v457, %v569
      %v577 = vadd.f32 %v462, %v569
      %v578 = vadd.f32 %v465, %v569
      %v579 = vadd.f32 %v470, %v569
      %v580 = vadd.f32 %v473, %v569
      %v581 = vadd.f32 %v478, %v569
      %v582 = vadd.f32 %v481, %v569
      %v583 = vadd.f32 %v486, %v569
      %v584 = vadd.f32 %v489, %v569
      %v585 = vadd.f32 %v494, %v569
      %v586 = vadd.f32 %v497, %v569
      %v587 = vadd.f32 %v502, %v569
      %v588 = vadd.f32 %v505, %v569
      %v589 = vadd.f32 %v510, %v569
      %v590 = vadd.f32 %v513, %v569
      %v591 = vadd.f32 %v518, %v569
      %v592 = vadd.f32 %v521, %v569
      %v593 = vadd.f32 %v526, %v569
      %v594 = vadd.f32 %v529, %v569
      %v595 = vadd.f32 %v534, %v569
      %v596 = vadd.f32 %v537, %v569
      %v597 = vadd.f32 %v542, %v569
      %v598 = vadd.f32 %v545, %v569
      %v599 = vadd.f32 %v550, %v569
      %v600 = vadd.f32 %v553, %v569
      %v601 = vadd.f32 %v558, %v569
      %v602 = vadd.f32 %v561, %v569
      %v603 = vld [vmem:[#allocation2] sm:$0xff]
      %v604 = vld [vmem:[#allocation2 + $0x8] sm:$0xff]
      %v605 = vmul.f32 %v603, 0.8
      %v606 = vmul.f32 %v604, 0.8
      %v607 = vadd.f32 %v605, %v571
      %v608 = vadd.f32 %v606, %v572
      %vm609 = vcmask 130048
      %610 = vst.msk [vmem:[%s215] sm:$0xff] %vm609, %v607
      %611 = vst.msk [vmem:[%s215 + $0x8] sm:$0xff] %vm609, %v608
      %v612 = vmul.f32 %v607, 0.8
      %v613 = vmul.f32 %v608, 0.8
      %v614 = vadd.f32 %v612, %v573
      %v615 = vadd.f32 %v613, %v574
      %s616 = scalar_lea.vmem %s215, 16
      %617 = vst.msk [vmem:[%s616] sm:$0xff] %vm609, %v614
      %618 = vst.msk [vmem:[%s616 + $0x8] sm:$0xff] %vm609, %v615
      %v619 = vmul.f32 %v614, 0.8
      %v620 = vmul.f32 %v615, 0.8
      %v621 = vadd.f32 %v619, %v575
      %v622 = vadd.f32 %v620, %v576
      %s623 = scalar_lea.vmem %s215, 32
      %624 = vst.msk [vmem:[%s623] sm:$0xff] %vm609, %v621
      %625 = vst.msk [vmem:[%s623 + $0x8] sm:$0xff] %vm609, %v622
      %v626 = vmul.f32 %v621, 0.8
      %v627 = vmul.f32 %v622, 0.8
      %v628 = vadd.f32 %v626, %v577
      %v629 = vadd.f32 %v627, %v578
      %s630 = scalar_lea.vmem %s215, 48
      %631 = vst.msk [vmem:[%s630] sm:$0xff] %vm609, %v628
      %632 = vst.msk [vmem:[%s630 + $0x8] sm:$0xff] %vm609, %v629
      %v633 = vmul.f32 %v628, 0.8
      %v634 = vmul.f32 %v629, 0.8
      %v635 = vadd.f32 %v633, %v579
      %v636 = vadd.f32 %v634, %v580
      %s637 = scalar_lea.vmem %s215, 64
      %638 = vst.msk [vmem:[%s637] sm:$0xff] %vm609, %v635
      %639 = vst.msk [vmem:[%s637 + $0x8] sm:$0xff] %vm609, %v636
      %v640 = vmul.f32 %v635, 0.8
      %v641 = vmul.f32 %v636, 0.8
      %v642 = vadd.f32 %v640, %v581
      %v643 = vadd.f32 %v641, %v582
      %s644 = scalar_lea.vmem %s215, 80
      %645 = vst.msk [vmem:[%s644] sm:$0xff] %vm609, %v642
      %646 = vst.msk [vmem:[%s644 + $0x8] sm:$0xff] %vm609, %v643
      %v647 = vmul.f32 %v642, 0.8
      %v648 = vmul.f32 %v643, 0.8
      %v649 = vadd.f32 %v647, %v583
      %v650 = vadd.f32 %v648, %v584
      %s651 = scalar_lea.vmem %s215, 96
      %652 = vst.msk [vmem:[%s651] sm:$0xff] %vm609, %v649
      %653 = vst.msk [vmem:[%s651 + $0x8] sm:$0xff] %vm609, %v650
      %v654 = vmul.f32 %v649, 0.8
      %v655 = vmul.f32 %v650, 0.8
      %v656 = vadd.f32 %v654, %v585
      %v657 = vadd.f32 %v655, %v586
      %s658 = scalar_lea.vmem %s215, 112
      %659 = vst.msk [vmem:[%s658] sm:$0xff] %vm609, %v656
      %660 = vst.msk [vmem:[%s658 + $0x8] sm:$0xff] %vm609, %v657
      %v661 = vmul.f32 %v656, 0.8
      %v662 = vmul.f32 %v657, 0.8
      %v663 = vadd.f32 %v661, %v587
      %v664 = vadd.f32 %v662, %v588
      %s665 = scalar_lea.vmem %s215, 128
      %666 = vst.msk [vmem:[%s665] sm:$0xff] %vm609, %v663
      %667 = vst.msk [vmem:[%s665 + $0x8] sm:$0xff] %vm609, %v664
      %v668 = vmul.f32 %v663, 0.8
      %v669 = vmul.f32 %v664, 0.8
      %v670 = vadd.f32 %v668, %v589
      %v671 = vadd.f32 %v669, %v590
      %s672 = scalar_lea.vmem %s215, 144
      %673 = vst.msk [vmem:[%s672] sm:$0xff] %vm609, %v670
      %674 = vst.msk [vmem:[%s672 + $0x8] sm:$0xff] %vm609, %v671
      %v675 = vmul.f32 %v670, 0.8
      %v676 = vmul.f32 %v671, 0.8
      %v677 = vadd.f32 %v675, %v591
      %v678 = vadd.f32 %v676, %v592
      %s679 = scalar_lea.vmem %s215, 160
      %680 = vst.msk [vmem:[%s679] sm:$0xff] %vm609, %v677
      %681 = vst.msk [vmem:[%s679 + $0x8] sm:$0xff] %vm609, %v678
      %v682 = vmul.f32 %v677, 0.8
      %v683 = vmul.f32 %v678, 0.8
      %v684 = vadd.f32 %v682, %v593
      %v685 = vadd.f32 %v683, %v594
      %s686 = scalar_lea.vmem %s215, 176
      %687 = vst.msk [vmem:[%s686] sm:$0xff] %vm609, %v684
      %688 = vst.msk [vmem:[%s686 + $0x8] sm:$0xff] %vm609, %v685
      %v689 = vmul.f32 %v684, 0.8
      %v690 = vmul.f32 %v685, 0.8
      %v691 = vadd.f32 %v689, %v595
      %v692 = vadd.f32 %v690, %v596
      %s693 = scalar_lea.vmem %s215, 192
      %694 = vst.msk [vmem:[%s693] sm:$0xff] %vm609, %v691
      %695 = vst.msk [vmem:[%s693 + $0x8] sm:$0xff] %vm609, %v692
      %v696 = vmul.f32 %v691, 0.8
      %v697 = vmul.f32 %v692, 0.8
      %v698 = vadd.f32 %v696, %v597
      %v699 = vadd.f32 %v697, %v598
      %s700 = scalar_lea.vmem %s215, 208
      %701 = vst.msk [vmem:[%s700] sm:$0xff] %vm609, %v698
      %702 = vst.msk [vmem:[%s700 + $0x8] sm:$0xff] %vm609, %v699
      %v703 = vmul.f32 %v698, 0.8
      %v704 = vmul.f32 %v699, 0.8
      %v705 = vadd.f32 %v703, %v599
      %v706 = vadd.f32 %v704, %v600
      %s707 = scalar_lea.vmem %s215, 224
      %708 = vst.msk [vmem:[%s707] sm:$0xff] %vm609, %v705
      %709 = vst.msk [vmem:[%s707 + $0x8] sm:$0xff] %vm609, %v706
      %v710 = vmul.f32 %v705, 0.8
      %v711 = vmul.f32 %v706, 0.8
      %v712 = vadd.f32 %v710, %v601
      %v713 = vadd.f32 %v711, %v602
      %s714 = scalar_lea.vmem %s215, 240
      %715 = vst.msk [vmem:[%s714] sm:$0xff] %vm609, %v712
      %716 = vst.msk [vmem:[%s714 + $0x8] sm:$0xff] %vm609, %v713
      %717 = vst.msk [vmem:[#allocation2] sm:$0xff] %vm609, %v712
      %718 = vst.msk [vmem:[#allocation2 + $0x8] sm:$0xff] %vm609, %v713
      %s719 = smul.u32 16, %s19
      %s720 = smul.u32 2, %s18
      %p721 = scmp.lt.s32.totalorder %s719, 47
      %s722 = scalar_select %p721, %s719, 47
      %p723 = scmp.lt.s32.totalorder %s720, 1
      %s724 = scalar_select %p723, %s720, 1
      %s725 = smul.addr %s722, 2
      %s726 = sadd.s32 %s724, %s725
      %s727 = smul.addr %s726, 8
      %s728 = scalar_lea.vmem %s3, %s727
      // Predicated region
      $region37: #{tpu_custom_call.1} parent=31 // pred_check
        %p729 = pneg %p116
      $region38: #{tpu_custom_call.1} parent=31 // pred_check_branch
        %731 = sbr.rel (%p729) target = $region40
      $region39: #{tpu_custom_call.1} parent=31 // pred_region
        %s732 = smul.u32 16, %s19
        %s733 = smul.u32 2, %s18
      $region40: #{tpu_custom_call.1} parent=31 // pred_fallthru
        _
    $region32: #{tpu_custom_call.1} parent=5 // pred_fallthru
      _
    %p734 = scmp.le.s32.totalorder 2, %s9
    // Predicated region
    $region41: #{tpu_custom_call.1} parent=5 // pred_check
      %p735 = pneg %p734
    $region42: #{tpu_custom_call.1} parent=5 // pred_check_branch
      %737 = sbr.rel (%p735) target = $region44
    $region43: #{tpu_custom_call.1} parent=5 // pred_region
      %s738 = ssub.s32 %s9, 2
      // Predicated region
      $region45: #{tpu_custom_call.1} parent=43 // pred_check
        %p739 = pneg %p122
      $region46: #{tpu_custom_call.1} parent=43 // pred_check_branch
        %741 = sbr.rel (%p739) target = $region48
      $region47: #{tpu_custom_call.1} parent=43 // pred_region
        %s742 = smul.u32 16, %s21
        %s743 = smul.u32 2, %s20
        %p744 = scmp.lt.s32.totalorder %s742, 47
        %s745 = scalar_select %p744, %s742, 47
        %p746 = scmp.lt.s32.totalorder %s743, 1
        %s747 = scalar_select %p746, %s743, 1
        %s748 = smul.addr %s745, 2
        %s749 = sadd.s32 %s747, %s748
        %s750 = smul.addr %s749, 8
        %s751 = scalar_lea.vmem %s3, %s750
      $region48: #{tpu_custom_call.1} parent=43 // pred_fallthru
        _
    $region44: #{tpu_custom_call.1} parent=5 // pred_fallthru
      _
  $region6: #{tpu_custom_call.1} parent=0 // loop_footer
    %s13 = sadd.s32 1, %s9
  $region7: #{tpu_custom_call.1} parent=0 // loop_footer_branch
    %8 = sbr.rel target = $region3
  $region8: #{tpu_custom_call.1} parent=0 // loop_exit
    _

</llo_original>
